<compile_context>
chip_gen: v5e
topology: v5e:2x2
jax: 0.10.0
libtpu: 0.0.40
codegen_flags: <defaults>
</compile_context>

<pallas_src>
import numpy as np
import jax
import jax.numpy as jnp
from jax.experimental import pallas as pl
from jax.experimental.pallas import tpu as pltpu

HIDDEN = 64        # fixed by MLP([., 64, .]) in the module
TILE_MAX = 128     # pair-tile edge; f32 intermediates fit v7x's 64 MiB VMEM


def _round_up(v, m):
    return ((v + m - 1) // m) * m


# --------------------------------------------------------------------------- #
# Kernel 1: per-node O(N) projections (lin_in + hoisted first MLP layers)
# --------------------------------------------------------------------------- #
def node_proj_kernel(x_ref, pos_ref, w_in_ref, b_in_ref, pw1_ref, pb1_ref,
                     whd_ref, whs_ref, ab1_ref, w_lin_ref,
                     tp_ref, sp_ref, ta_ref, sa_ref, xl_ref):
    h = jnp.maximum(
        jnp.dot(x_ref[...], w_in_ref[...], preferred_element_type=jnp.float32)
        + b_in_ref[...], 0.0)
    pproj = jnp.dot(pos_ref[...], pw1_ref[...], preferred_element_type=jnp.float32)
    sp_ref[...] = pproj                       # pos @ pw1            (source side)
    tp_ref[...] = pproj + pb1_ref[...]        # pos @ pw1 + pb1      (target side, bias folded)
    ta_ref[...] = jnp.dot(h, whd_ref[...],
                          preferred_element_type=jnp.float32) + ab1_ref[...]
    sa_ref[...] = jnp.dot(h, whs_ref[...], preferred_element_type=jnp.float32)
    xl_ref[...] = jnp.dot(h, w_lin_ref[...], preferred_element_type=jnp.float32)


# --------------------------------------------------------------------------- #
# Kernel 2: tiled pairwise attention, online masked softmax + lin_out
# --------------------------------------------------------------------------- #
def pair_attn_kernel(counts_ref, mask_ref, tp_ref, sp_ref, ta_ref, sa_ref, xl_ref,
                     pw2_ref, pb2_ref, aw1_ref, aw2_ref, ab2_ref,
                     w_out_ref, b_out_ref,
                     o_ref,
                     m_sc, l_sc, acc_sc):
    i = pl.program_id(0)
    j = pl.program_id(1)

    @pl.when(j == 0)
    def _():
        # attn_nn ends in ReLU -> logits >= 0, so 0 is a valid lower bound for the max.
        m_sc[...] = jnp.zeros_like(m_sc)
        l_sc[...] = jnp.zeros_like(l_sc)
        acc_sc[...] = jnp.zeros_like(acc_sc)

    @pl.when(counts_ref[i, j] > 0)           # skip tiles with no edges (sparse graphs)
    def _():
        ti, hid = tp_ref.shape
        tj = sp_ref.shape[0]
        c_out = xl_ref.shape[1]

        # Mask broadcast materialized once and reused (JAX does not CSE broadcasts).
        validc = jnp.broadcast_to((mask_ref[...] > 0)[:, :, None], (ti, tj, c_out))

        # pos_nn: layer 1 hoisted -> VPU broadcast-subtract; layer 2 on the MXU
        # (bf16 operands, f32 accumulate).
        pd1 = jnp.maximum(tp_ref[...][:, None, :] - sp_ref[...][None, :, :], 0.0)
        delta = jnp.dot(pd1.reshape(ti * tj, hid).astype(jnp.bfloat16), pw2_ref[...],
                        preferred_element_type=jnp.float32)
        delta = jnp.maximum(delta + pb2_ref[...], 0.0)                # [TI*TJ, C_out]

        # attn_nn layer 1: hoisted node terms + the per-pair delta @ aw1 term
        # (faithful semantics: attention input is a_dst_i - a_src_j + delta_ij).
        ad1 = (ta_ref[...][:, None, :] - sa_ref[...][None, :, :]).reshape(ti * tj, hid)
        a1 = jnp.maximum(
            ad1 + jnp.dot(delta.astype(jnp.bfloat16), aw1_ref[...],
                          preferred_element_type=jnp.float32), 0.0)
        logits = jnp.dot(a1.astype(jnp.bfloat16), aw2_ref[...],
                         preferred_element_type=jnp.float32)
        logits = jnp.maximum(logits + ab2_ref[...], 0.0).reshape(ti, tj, c_out)
        delta = delta.reshape(ti, tj, c_out)

        # Online masked softmax over the source axis (per target row, per channel).
        m_old = m_sc[...]
        t_max = jnp.max(jnp.where(validc, logits, jnp.float32(-1e30)), axis=1)
        m_new = jnp.maximum(m_old, t_max)
        rescale = jnp.exp(m_old - m_new)
        e = jnp.where(validc, jnp.exp(logits - m_new[:, None, :]), 0.0)
        l_sc[...] = rescale * l_sc[...] + jnp.sum(e, axis=1)
        acc_sc[...] = rescale * acc_sc[...] + jnp.sum(
            e * (xl_ref[...][None, :, :] + delta), axis=1)
        m_sc[...] = m_new

    @pl.when(j == pl.num_programs(1) - 1)
    def _():
        agg = acc_sc[...] / jnp.maximum(l_sc[...], jnp.float32(1e-16))  # exact divide
        out = jnp.dot(agg, w_out_ref[...], preferred_element_type=jnp.float32)
        # lane-dense store: output channels zero-padded to a multiple of 128
        o_ref[...] = jnp.maximum(out + b_out_ref[...], 0.0)


# --------------------------------------------------------------------------- #
# Host-side wrapper
# --------------------------------------------------------------------------- #
def edge_index_to_mask(edge_index, num_nodes):
    """Dense int8 mask[i, j] = 1 iff edge j->i; remove_self_loops + add_self_loops."""
    src, dst = edge_index[0], edge_index[1]
    m = jnp.zeros((num_nodes, num_nodes), jnp.int8).at[dst, src].set(1)
    eye = jnp.eye(num_nodes, dtype=jnp.int8)
    m = m * (1 - eye)            # remove self loops
    m = jnp.maximum(m, eye)      # add self loops for every node
    return m


def transformer_block(x, pos, edge_index, p, *, tile=TILE_MAX):
    N, c_in = x.shape
    c_out = p["w_lin"].shape[1]
    hidden = p["pos_w1"].shape[1]

    # ---- host-side weight fusion / bf16 casts (done once, exact algebra) ----
    whd = p["w_dst"] @ p["att_w1"]                      # [c_in, hidden]
    whs = p["w_src"] @ p["att_w1"]                      # [c_in, hidden]
    pw2_b = p["pos_w2"].astype(jnp.bfloat16)            # [hidden, c_out]
    aw1_b = p["att_w1"].astype(jnp.bfloat16)            # [c_out, hidden]
    aw2_b = p["att_w2"].astype(jnp.bfloat16)            # [hidden, c_out]
    c_pad = _round_up(c_out, 128)
    w_out_pad = jnp.zeros((c_out, c_pad), jnp.float32).at[:, :c_out].set(p["w_out"])
    b_out_pad = jnp.zeros((1, c_pad), jnp.float32).at[:, :c_out].set(p["b_out"])

    # ---- node padding / tile selection ----
    if N <= tile:
        n_pad = max(64, _round_up(N, 64))
        ti, tj = n_pad // 2, n_pad        # >=2 steps on the parallel axis (v7x has 2 TCs)
    else:
        ti = tj = tile
        n_pad = _round_up(N, tile)

    xp = jnp.zeros((n_pad, c_in), jnp.float32).at[:N].set(x)
    pp = jnp.zeros((n_pad, 3), jnp.float32).at[:N].set(pos)
    mask = jnp.zeros((n_pad, n_pad), jnp.int8).at[:N, :N].set(
        edge_index_to_mask(edge_index, N))

    gi, gj = n_pad // ti, n_pad // tj
    # per-(i,j)-tile edge counts -> SMEM scalar prefetch; lets the kernel skip empty tiles
    counts = mask.astype(jnp.int32).reshape(gi, ti, gj, tj).sum(axis=(1, 3))

    # ---- kernel 1: per-node projections (gridded over node rows) ----
    rb = min(n_pad, 128)
    row = lambda r: (r, 0)
    full1 = lambda r: (0, 0)
    tp, sp, ta, sa, xl = pl.pallas_call(
        node_proj_kernel,
        out_shape=(
            jax.ShapeDtypeStruct((n_pad, hidden), jnp.float32),   # pos@pw1 + pb1 (target)
            jax.ShapeDtypeStruct((n_pad, hidden), jnp.float32),   # pos@pw1       (source)
            jax.ShapeDtypeStruct((n_pad, hidden), jnp.float32),   # h@(w_dst@aw1) + ab1
            jax.ShapeDtypeStruct((n_pad, hidden), jnp.float32),   # h@(w_src@aw1)
            jax.ShapeDtypeStruct((n_pad, c_out), jnp.float32),    # value projection
        ),
        grid_spec=pltpu.PrefetchScalarGridSpec(
            num_scalar_prefetch=0,
            grid=(n_pad // rb,),
            in_specs=[
                pl.BlockSpec((rb, c_in), row),
                pl.BlockSpec((rb, 3), row),
                pl.BlockSpec((c_in, c_in), full1),
                pl.BlockSpec((1, c_in), full1),
                pl.BlockSpec((3, hidden), full1),
                pl.BlockSpec((1, hidden), full1),
                pl.BlockSpec((c_in, hidden), full1),
                pl.BlockSpec((c_in, hidden), full1),
                pl.BlockSpec((1, hidden), full1),
                pl.BlockSpec((c_in, c_out), full1),
            ],
            out_specs=[
                pl.BlockSpec((rb, hidden), row),
                pl.BlockSpec((rb, hidden), row),
                pl.BlockSpec((rb, hidden), row),
                pl.BlockSpec((rb, hidden), row),
                pl.BlockSpec((rb, c_out), row),
            ],
        ),
        compiler_params=pltpu.CompilerParams(dimension_semantics=("parallel",)),
    )(xp, pp, p["w_in"], p["b_in"], p["pos_w1"], p["pos_b1"],
      whd, whs, p["att_b1"], p["w_lin"])

    # ---- kernel 2: tiled pairwise attention ----
    full = lambda i, j, c: (0, 0)
    m_pairs = n_pad * n_pad
    cost = pl.CostEstimate(
        flops=int(2 * m_pairs * hidden * c_out * 2       # pos layer2 + attn layer2
                  + 2 * m_pairs * c_out * hidden         # delta @ aw1
                  + 2 * n_pad * c_out * c_pad            # lin_out
                  + m_pairs * (3 * hidden + 12 * c_out)),
        transcendentals=int(m_pairs * c_out),
        bytes_accessed=int(m_pairs                                   # int8 mask
                           + gi * n_pad * (2 * hidden + c_out) * 4   # streamed source feats
                           + n_pad * 2 * hidden * 4                  # target feats
                           + n_pad * c_pad * 4))                     # output slab

    out_pad = pl.pallas_call(
        pair_attn_kernel,
        out_shape=jax.ShapeDtypeStruct((n_pad, c_pad), jnp.float32),
        grid_spec=pltpu.PrefetchScalarGridSpec(
            num_scalar_prefetch=1,                                   # counts -> SMEM
            grid=(gi, gj),
            in_specs=[
                pl.BlockSpec((ti, tj), lambda i, j, c: (i, j)),        # mask tile (int8)
                pl.BlockSpec((ti, hidden), lambda i, j, c: (i, 0)),    # tp (target)
                pl.BlockSpec((tj, hidden), lambda i, j, c: (j, 0)),    # sp (source)
                pl.BlockSpec((ti, hidden), lambda i, j, c: (i, 0)),    # ta (target)
                pl.BlockSpec((tj, hidden), lambda i, j, c: (j, 0)),    # sa (source)
                pl.BlockSpec((tj, c_out), lambda i, j, c: (j, 0)),     # x_lin (source)
                pl.BlockSpec((hidden, c_out), full),                   # pos_nn w2 (bf16)
                pl.BlockSpec((1, c_out), full),                        # pos_nn b2
                pl.BlockSpec((c_out, hidden), full),                   # attn_nn w1 (bf16)
                pl.BlockSpec((hidden, c_out), full),                   # attn_nn w2 (bf16)
                pl.BlockSpec((1, c_out), full),                        # attn_nn b2
                pl.BlockSpec((c_out, c_pad), full),                    # lin_out w (padded)
                pl.BlockSpec((1, c_pad), full),                        # lin_out b (padded)
            ],
            out_specs=pl.BlockSpec((ti, c_pad), lambda i, j, c: (i, 0)),
            scratch_shapes=[
                pltpu.VMEM((ti, c_out), jnp.float32),   # running max
                pltpu.VMEM((ti, c_out), jnp.float32),   # running denominator
                pltpu.VMEM((ti, c_out), jnp.float32),   # accumulator
            ],
        ),
        compiler_params=pltpu.CompilerParams(
            dimension_semantics=("parallel", "arbitrary"),
            vmem_limit_bytes=48 * 1024 * 1024,
        ),
        cost_estimate=cost,
    )(counts, mask, tp, sp, ta, sa, xl,
      pw2_b, p["pos_b2"], aw1_b, aw2_b, p["att_b2"],
      w_out_pad, b_out_pad)

    return out_pad[:N, :c_out]


# --------------------------------------------------------------------------- #
# Parameters / reference / demo
# --------------------------------------------------------------------------- #
def init_params(key, c_in, c_out, hidden=HIDDEN):
    """Deterministic init mimicking torch Linear default U(-1/sqrt(fan_in), 1/sqrt(fan_in)).
    Weights stored transposed ([fan_in, fan_out]) so kernels compute x @ W.
    lin / lin_src / lin_dst are bias-free, exactly as in PointTransformerConv."""
    keys = jax.random.split(key, 16)

    def unif(k, shape, fan_in):
        b = 1.0 / float(np.sqrt(fan_in))
        return jax.random.uniform(k, shape, jnp.float32, -b, b)

    p = {}
    p["w_in"]   = unif(keys[0],  (c_in, c_in),   c_in)
    p["b_in"]   = unif(keys[1],  (1, c_in),      c_in)
    p["w_lin"]  = unif(keys[2],  (c_in, c_out),  c_in)
    p["w_src"]  = unif(keys[3],  (c_in, c_out),  c_in)
    p["w_dst"]  = unif(keys[4],  (c_in, c_out),  c_in)
    p["pos_w1"] = unif(keys[5],  (3, hidden),    3)
    p["pos_b1"] = unif(keys[6],  (1, hidden),    3)
    p["pos_w2"] = unif(keys[7],  (hidden, c_out), hidden)
    p["pos_b2"] = unif(keys[8],  (1, c_out),     hidden)
    p["att_w1"] = unif(keys[9],  (c_out, hidden), c_out)
    p["att_b1"] = unif(keys[10], (1, hidden),    c_out)
    p["att_w2"] = unif(keys[11], (hidden, c_out), hidden)
    p["att_b2"] = unif(keys[12], (1, c_out),     hidden)
    p["w_out"]  = unif(keys[13], (c_out, c_out), c_out)
    p["b_out"]  = unif(keys[14], (1, c_out),     c_out)
    return p


def reference(x, pos, mask, p):
    """Pure-JAX dense reference with the original (un-fused, all-f32) weights."""
    relu = jax.nn.relu
    h = relu(x @ p["w_in"] + p["b_in"])
    x_lin = h @ p["w_lin"]
    a_src = h @ p["w_src"]
    a_dst = h @ p["w_dst"]
    pd = pos[:, None, :] - pos[None, :, :]
    d = relu(pd @ p["pos_w1"] + p["pos_b1"])
    d = relu(d @ p["pos_w2"] + p["pos_b2"])                 # delta_ij
    al = a_dst[:, None, :] - a_src[None, :, :] + d          # + delta (PointTransformerConv)
    a = relu(al @ p["att_w1"] + p["att_b1"])
    a = relu(a @ p["att_w2"] + p["att_b2"])
    m = mask[:, :, None]
    a_m = jnp.where(m > 0, a, -1e30)
    amax = a_m.max(axis=1, keepdims=True)
    e = jnp.where(m > 0, jnp.exp(a - amax), 0.0)
    attn = e / jnp.maximum(e.sum(axis=1, keepdims=True), 1e-16)
    agg = (attn * (x_lin[None, :, :] + d)).sum(axis=1)
    return relu(agg @ p["w_out"] + p["b_out"])


if __name__ == "__main__":
    N, C_IN, C_OUT = 16, 32, 32

    key = jax.random.PRNGKey(0)
    kx, kp, kw = jax.random.split(key, 3)

    x = jax.random.normal(kx, (N, C_IN), jnp.float32)
    pos = jax.random.normal(kp, (N, 3), jnp.float32)

    # deterministic chain graph (both directions), like a skeleton edge list
    src = jnp.concatenate([jnp.arange(N - 1), jnp.arange(1, N)])
    dst = jnp.concatenate([jnp.arange(1, N), jnp.arange(N - 1)])
    edge_index = jnp.stack([src, dst]).astype(jnp.int32)   # [2, E], row0=source, row1=target

    params = init_params(kw, C_IN, C_OUT)

    out = transformer_block(x, pos, edge_index, params)
    out = jax.block_until_ready(out)

    ref = reference(x, pos,
                    edge_index_to_mask(edge_index, N).astype(jnp.float32), params)
    # bf16 MXU operands (f32 accumulate) shift parity from ~1e-4 to ~1e-3; 5e-3 gives margin.
    np.testing.assert_allclose(np.asarray(out), np.asarray(ref), rtol=5e-3, atol=5e-3)

    print("KERNEL_OK")
</pallas_src>

<mosaic_0001>
module attributes {stable_mosaic.version = 11 : i64} {
  func.func @node_proj_kernel(%arg0: i32, %arg1: memref<64x32xf32, #tpu.memory_space<vmem>>, %arg2: memref<64x3xf32, #tpu.memory_space<vmem>>, %arg3: memref<32x32xf32, #tpu.memory_space<vmem>>, %arg4: memref<1x32xf32, #tpu.memory_space<vmem>>, %arg5: memref<3x64xf32, #tpu.memory_space<vmem>>, %arg6: memref<1x64xf32, #tpu.memory_space<vmem>>, %arg7: memref<32x64xf32, #tpu.memory_space<vmem>>, %arg8: memref<32x64xf32, #tpu.memory_space<vmem>>, %arg9: memref<1x64xf32, #tpu.memory_space<vmem>>, %arg10: memref<32x32xf32, #tpu.memory_space<vmem>>, %arg11: memref<64x64xf32, #tpu.memory_space<vmem>>, %arg12: memref<64x64xf32, #tpu.memory_space<vmem>>, %arg13: memref<64x64xf32, #tpu.memory_space<vmem>>, %arg14: memref<64x64xf32, #tpu.memory_space<vmem>>, %arg15: memref<64x32xf32, #tpu.memory_space<vmem>>) attributes {dimension_semantics = [#tpu.dimension_semantics<parallel>], iteration_bounds = array<i64: 1>, scalar_prefetch = 0 : i64, scratch_operands = 0 : i64, tpu.core_type = #tpu.core_type<tc>, window_params = [{transform_indices = @transform_0, window_bounds = array<i64: 64, 32>}, {transform_indices = @transform_1, window_bounds = array<i64: 64, 3>}, {pipeline_mode = #tpu.pipeline_mode<synchronous>, transform_indices = @transform_2, window_bounds = array<i64: 32, 32>}, {pipeline_mode = #tpu.pipeline_mode<synchronous>, transform_indices = @transform_3, window_bounds = array<i64: 1, 32>}, {pipeline_mode = #tpu.pipeline_mode<synchronous>, transform_indices = @transform_4, window_bounds = array<i64: 3, 64>}, {pipeline_mode = #tpu.pipeline_mode<synchronous>, transform_indices = @transform_5, window_bounds = array<i64: 1, 64>}, {pipeline_mode = #tpu.pipeline_mode<synchronous>, transform_indices = @transform_6, window_bounds = array<i64: 32, 64>}, {pipeline_mode = #tpu.pipeline_mode<synchronous>, transform_indices = @transform_7, window_bounds = array<i64: 32, 64>}, {pipeline_mode = #tpu.pipeline_mode<synchronous>, transform_indices = @transform_8, window_bounds = array<i64: 1, 64>}, {pipeline_mode = #tpu.pipeline_mode<synchronous>, transform_indices = @transform_9, window_bounds = array<i64: 32, 32>}, {transform_indices = @transform_10, window_bounds = array<i64: 64, 64>}, {transform_indices = @transform_11, window_bounds = array<i64: 64, 64>}, {transform_indices = @transform_12, window_bounds = array<i64: 64, 64>}, {transform_indices = @transform_13, window_bounds = array<i64: 64, 64>}, {transform_indices = @transform_14, window_bounds = array<i64: 64, 32>}]} {
    %c0 = arith.constant 0 : index
    %c0_0 = arith.constant 0 : index
    %0 = vector.load %arg1[%c0, %c0_0] : memref<64x32xf32, #tpu.memory_space<vmem>>, vector<64x32xf32>
    %c0_1 = arith.constant 0 : index
    %c0_2 = arith.constant 0 : index
    %1 = vector.load %arg3[%c0_1, %c0_2] : memref<32x32xf32, #tpu.memory_space<vmem>>, vector<32x32xf32>
    %cst = arith.constant dense<0.000000e+00> : vector<64x32xf32>
    %2 = tpu.matmul %0, %1, %cst {dimension_numbers = #tpu.dot_dimension_numbers<[1], [0], [0], [1], [0, 0, 1, 1], [], []>} : vector<64x32xf32>, vector<32x32xf32>, vector<64x32xf32> -> vector<64x32xf32>
    %c0_3 = arith.constant 0 : index
    %c0_4 = arith.constant 0 : index
    %3 = vector.load %arg4[%c0_3, %c0_4] : memref<1x32xf32, #tpu.memory_space<vmem>>, vector<1x32xf32>
    %4 = vector.broadcast %3 : vector<1x32xf32> to vector<64x32xf32>
    %5 = arith.addf %2, %4 : vector<64x32xf32>
    %cst_5 = arith.constant 0.000000e+00 : f32
    %6 = vector.broadcast %cst_5 : f32 to vector<64x32xf32>
    %7 = arith.maximumf %5, %6 : vector<64x32xf32>
    %c0_6 = arith.constant 0 : index
    %c0_7 = arith.constant 0 : index
    %8 = vector.load %arg2[%c0_6, %c0_7] : memref<64x3xf32, #tpu.memory_space<vmem>>, vector<64x3xf32>
    %c0_8 = arith.constant 0 : index
    %c0_9 = arith.constant 0 : index
    %9 = vector.load %arg5[%c0_8, %c0_9] : memref<3x64xf32, #tpu.memory_space<vmem>>, vector<3x64xf32>
    %cst_10 = arith.constant dense<0.000000e+00> : vector<64x64xf32>
    %10 = tpu.matmul %8, %9, %cst_10 {dimension_numbers = #tpu.dot_dimension_numbers<[1], [0], [0], [1], [0, 0, 1, 1], [], []>} : vector<64x3xf32>, vector<3x64xf32>, vector<64x64xf32> -> vector<64x64xf32>
    %c0_11 = arith.constant 0 : index
    %c0_12 = arith.constant 0 : index
    %11 = vector.load %arg12[%c0_11, %c0_12] : memref<64x64xf32, #tpu.memory_space<vmem>>, vector<64x64xf32>
    tpu.vector_store %arg12[%c0_11, %c0_12], %10 {strides = array<i32>} : memref<64x64xf32, #tpu.memory_space<vmem>>, vector<64x64xf32>,
    %c0_13 = arith.constant 0 : index
    %c0_14 = arith.constant 0 : index
    %12 = vector.load %arg6[%c0_13, %c0_14] : memref<1x64xf32, #tpu.memory_space<vmem>>, vector<1x64xf32>
    %13 = vector.broadcast %12 : vector<1x64xf32> to vector<64x64xf32>
    %14 = arith.addf %10, %13 : vector<64x64xf32>
    %c0_15 = arith.constant 0 : index
    %c0_16 = arith.constant 0 : index
    %15 = vector.load %arg11[%c0_15, %c0_16] : memref<64x64xf32, #tpu.memory_space<vmem>>, vector<64x64xf32>
    tpu.vector_store %arg11[%c0_15, %c0_16], %14 {strides = array<i32>} : memref<64x64xf32, #tpu.memory_space<vmem>>, vector<64x64xf32>,
    %c0_17 = arith.constant 0 : index
    %c0_18 = arith.constant 0 : index
    %16 = vector.load %arg7[%c0_17, %c0_18] : memref<32x64xf32, #tpu.memory_space<vmem>>, vector<32x64xf32>
    %cst_19 = arith.constant dense<0.000000e+00> : vector<64x64xf32>
    %17 = tpu.matmul %7, %16, %cst_19 {dimension_numbers = #tpu.dot_dimension_numbers<[1], [0], [0], [1], [0, 0, 1, 1], [], []>} : vector<64x32xf32>, vector<32x64xf32>, vector<64x64xf32> -> vector<64x64xf32>
    %c0_20 = arith.constant 0 : index
    %c0_21 = arith.constant 0 : index
    %18 = vector.load %arg9[%c0_20, %c0_21] : memref<1x64xf32, #tpu.memory_space<vmem>>, vector<1x64xf32>
    %19 = vector.broadcast %18 : vector<1x64xf32> to vector<64x64xf32>
    %20 = arith.addf %17, %19 : vector<64x64xf32>
    %c0_22 = arith.constant 0 : index
    %c0_23 = arith.constant 0 : index
    %21 = vector.load %arg13[%c0_22, %c0_23] : memref<64x64xf32, #tpu.memory_space<vmem>>, vector<64x64xf32>
    tpu.vector_store %arg13[%c0_22, %c0_23], %20 {strides = array<i32>} : memref<64x64xf32, #tpu.memory_space<vmem>>, vector<64x64xf32>,
    %c0_24 = arith.constant 0 : index
    %c0_25 = arith.constant 0 : index
    %22 = vector.load %arg8[%c0_24, %c0_25] : memref<32x64xf32, #tpu.memory_space<vmem>>, vector<32x64xf32>
    %cst_26 = arith.constant dense<0.000000e+00> : vector<64x64xf32>
    %23 = tpu.matmul %7, %22, %cst_26 {dimension_numbers = #tpu.dot_dimension_numbers<[1], [0], [0], [1], [0, 0, 1, 1], [], []>} : vector<64x32xf32>, vector<32x64xf32>, vector<64x64xf32> -> vector<64x64xf32>
    %c0_27 = arith.constant 0 : index
    %c0_28 = arith.constant 0 : index
    %24 = vector.load %arg14[%c0_27, %c0_28] : memref<64x64xf32, #tpu.memory_space<vmem>>, vector<64x64xf32>
    tpu.vector_store %arg14[%c0_27, %c0_28], %23 {strides = array<i32>} : memref<64x64xf32, #tpu.memory_space<vmem>>, vector<64x64xf32>,
    %c0_29 = arith.constant 0 : index
    %c0_30 = arith.constant 0 : index
    %25 = vector.load %arg10[%c0_29, %c0_30] : memref<32x32xf32, #tpu.memory_space<vmem>>, vector<32x32xf32>
    %cst_31 = arith.constant dense<0.000000e+00> : vector<64x32xf32>
    %26 = tpu.matmul %7, %25, %cst_31 {dimension_numbers = #tpu.dot_dimension_numbers<[1], [0], [0], [1], [0, 0, 1, 1], [], []>} : vector<64x32xf32>, vector<32x32xf32>, vector<64x32xf32> -> vector<64x32xf32>
    %c0_32 = arith.constant 0 : index
    %c0_33 = arith.constant 0 : index
    %27 = vector.load %arg15[%c0_32, %c0_33] : memref<64x32xf32, #tpu.memory_space<vmem>>, vector<64x32xf32>
    tpu.vector_store %arg15[%c0_32, %c0_33], %26 {strides = array<i32>} : memref<64x32xf32, #tpu.memory_space<vmem>>, vector<64x32xf32>,
    return
  }
  func.func @transform_0(%arg0: i32) -> (i32, i32) {
    %c0_i32 = arith.constant 0 : i32
    %c0_i32_0 = arith.constant 0 : i32
    return %arg0, %c0_i32 : i32, i32
  }
  func.func @transform_1(%arg0: i32) -> (i32, i32) {
    %c0_i32 = arith.constant 0 : i32
    %c0_i32_0 = arith.constant 0 : i32
    return %arg0, %c0_i32 : i32, i32
  }
  func.func @transform_2(%arg0: i32) -> (i32, i32) {
    %c0_i32 = arith.constant 0 : i32
    %c0_i32_0 = arith.constant 0 : i32
    %c0_i32_1 = arith.constant 0 : i32
    return %c0_i32, %c0_i32_0 : i32, i32
  }
  func.func @transform_3(%arg0: i32) -> (i32, i32) {
    %c0_i32 = arith.constant 0 : i32
    %c0_i32_0 = arith.constant 0 : i32
    %c0_i32_1 = arith.constant 0 : i32
    return %c0_i32, %c0_i32_0 : i32, i32
  }
  func.func @transform_4(%arg0: i32) -> (i32, i32) {
    %c0_i32 = arith.constant 0 : i32
    %c0_i32_0 = arith.constant 0 : i32
    %c0_i32_1 = arith.constant 0 : i32
    return %c0_i32, %c0_i32_0 : i32, i32
  }
  func.func @transform_5(%arg0: i32) -> (i32, i32) {
    %c0_i32 = arith.constant 0 : i32
    %c0_i32_0 = arith.constant 0 : i32
    %c0_i32_1 = arith.constant 0 : i32
    return %c0_i32, %c0_i32_0 : i32, i32
  }
  func.func @transform_6(%arg0: i32) -> (i32, i32) {
    %c0_i32 = arith.constant 0 : i32
    %c0_i32_0 = arith.constant 0 : i32
    %c0_i32_1 = arith.constant 0 : i32
    return %c0_i32, %c0_i32_0 : i32, i32
  }
  func.func @transform_7(%arg0: i32) -> (i32, i32) {
    %c0_i32 = arith.constant 0 : i32
    %c0_i32_0 = arith.constant 0 : i32
    %c0_i32_1 = arith.constant 0 : i32
    return %c0_i32, %c0_i32_0 : i32, i32
  }
  func.func @transform_8(%arg0: i32) -> (i32, i32) {
    %c0_i32 = arith.constant 0 : i32
    %c0_i32_0 = arith.constant 0 : i32
    %c0_i32_1 = arith.constant 0 : i32
    return %c0_i32, %c0_i32_0 : i32, i32
  }
  func.func @transform_9(%arg0: i32) -> (i32, i32) {
    %c0_i32 = arith.constant 0 : i32
    %c0_i32_0 = arith.constant 0 : i32
    %c0_i32_1 = arith.constant 0 : i32
    return %c0_i32, %c0_i32_0 : i32, i32
  }
  func.func @transform_10(%arg0: i32) -> (i32, i32) {
    %c0_i32 = arith.constant 0 : i32
    %c0_i32_0 = arith.constant 0 : i32
    return %arg0, %c0_i32 : i32, i32
  }
  func.func @transform_11(%arg0: i32) -> (i32, i32) {
    %c0_i32 = arith.constant 0 : i32
    %c0_i32_0 = arith.constant 0 : i32
    return %arg0, %c0_i32 : i32, i32
  }
  func.func @transform_12(%arg0: i32) -> (i32, i32) {
    %c0_i32 = arith.constant 0 : i32
    %c0_i32_0 = arith.constant 0 : i32
    return %arg0, %c0_i32 : i32, i32
  }
  func.func @transform_13(%arg0: i32) -> (i32, i32) {
    %c0_i32 = arith.constant 0 : i32
    %c0_i32_0 = arith.constant 0 : i32
    return %arg0, %c0_i32 : i32, i32
  }
  func.func @transform_14(%arg0: i32) -> (i32, i32) {
    %c0_i32 = arith.constant 0 : i32
    %c0_i32_0 = arith.constant 0 : i32
    return %arg0, %c0_i32 : i32, i32
  }
}

</mosaic_0001>

<llo_original>
// kernel: tpu_custom_call.1
$region0: #{tpu_custom_call.1}
  #allocation0 [shape = 'u32[]', space=smem, size = 0x4, offset = 0x4, fixed_abs, tag = 'smem constant byte address 0x4 - core index']
  #allocation1 [shape = 'u32[72,128]{1,0:T(1,128)}', space=vmem, size = 0x9000, scoped, tag = 'internal scratch']
  %s0 = inlined_call_operand.vmem [shape: f32[64,32], index: 0, kind: input, shape index: {}]
  %s1 = inlined_call_operand.vmem [shape: f32[64,3], index: 1, kind: input, shape index: {}]
  %s2 = inlined_call_operand.vmem [shape: f32[32,32], index: 2, kind: input, shape index: {}]
  %s3 = inlined_call_operand.vmem [shape: f32[1,32], index: 3, kind: input, shape index: {}]
  %s4 = inlined_call_operand.vmem [shape: f32[3,64], index: 4, kind: input, shape index: {}]
  %s5 = inlined_call_operand.vmem [shape: f32[1,64], index: 5, kind: input, shape index: {}]
  %s6 = inlined_call_operand.vmem [shape: f32[32,64], index: 6, kind: input, shape index: {}]
  %s7 = inlined_call_operand.vmem [shape: f32[32,64], index: 7, kind: input, shape index: {}]
  %s8 = inlined_call_operand.vmem [shape: f32[1,64], index: 8, kind: input, shape index: {}]
  %s9 = inlined_call_operand.vmem [shape: f32[32,32], index: 9, kind: input, shape index: {}]
  %s10 = inlined_call_operand.hbm [shape: f32[64,64], index: 10, kind: output, shape index: {0}]
  %s11 = inlined_call_operand.hbm [shape: f32[64,64], index: 11, kind: output, shape index: {1}]
  %s12 = inlined_call_operand.hbm [shape: f32[64,64], index: 12, kind: output, shape index: {2}]
  %s13 = inlined_call_operand.hbm [shape: f32[64,64], index: 13, kind: output, shape index: {3}]
  %s14 = inlined_call_operand.vmem [shape: f32[64,32], index: 14, kind: output, shape index: {4}]
  %15 = xla_tuple %s10, %s11, %s12, %s13, %s14
  %s16 = sld [smem:[#allocation0]]
  $region82: #{tpu_custom_call.1} parent=0
    _
  %s18 = ssub.s32 1, %s16
  %s19 = scalar_select 0, %s18, %s16
  $region1: #{tpu_custom_call.1} parent=0
    #allocation2 [shape = 'u8[32768]{0}', space=vmem, size = 0x8000, scoped, tag = 'output window, operand 0, single buffered']
    #allocation3 [shape = 's32[1]{0}', space=sflag, size = 0x4, scoped, tag = 'scoped memory for tpu_custom_call.1']
    #allocation4 [shape = 'u8[32768]{0}', space=vmem, size = 0x8000, scoped, tag = 'output window, operand 1, single buffered']
    #allocation5 [shape = 's32[1]{0}', space=sflag, size = 0x4, scoped, tag = 'scoped memory for tpu_custom_call.1']
    #allocation6 [shape = 'u8[32768]{0}', space=vmem, size = 0x8000, scoped, tag = 'output window, operand 2, single buffered']
    #allocation7 [shape = 'u8[32768]{0}', space=vmem, size = 0x8000, scoped, tag = 'output window, operand 3, single buffered']
    #allocation8 [shape = 's32[1]{0}', space=sflag, size = 0x4, scoped, tag = 'scoped memory for tpu_custom_call.1']
    %20 = vsyncpa [#allocation3], 0
    %21 = vsyncpa [#allocation5], 0
    %22 = vsyncpa [#allocation8], 0
    // Predicated region
    $region2: #{tpu_custom_call.1} parent=1 // pred_check
      _
    $region3: #{tpu_custom_call.1} parent=1 // pred_check_branch
      %24 = sbr.rel (0) target = $region5
    $region4: #{tpu_custom_call.1} parent=1 // pred_region
      _
    $region5: #{tpu_custom_call.1} parent=1 // pred_fallthru
      _
    // Predicated region
    $region6: #{tpu_custom_call.1} parent=1 // pred_check
      _
    $region7: #{tpu_custom_call.1} parent=1 // pred_check_branch
      %26 = sbr.rel (0) target = $region9
    $region8: #{tpu_custom_call.1} parent=1 // pred_region
      _
    $region9: #{tpu_custom_call.1} parent=1 // pred_fallthru
      _
    // Predicated region
    $region10: #{tpu_custom_call.1} parent=1 // pred_check
      _
    $region11: #{tpu_custom_call.1} parent=1 // pred_check_branch
      %28 = sbr.rel (0) target = $region13
    $region12: #{tpu_custom_call.1} parent=1 // pred_region
      _
    $region13: #{tpu_custom_call.1} parent=1 // pred_fallthru
      _
    // Predicated region
    $region14: #{tpu_custom_call.1} parent=1 // pred_check
      _
    $region15: #{tpu_custom_call.1} parent=1 // pred_check_branch
      %30 = sbr.rel (0) target = $region17
    $region16: #{tpu_custom_call.1} parent=1 // pred_region
      _
    $region17: #{tpu_custom_call.1} parent=1 // pred_fallthru
      _
    // Predicated region
    $region18: #{tpu_custom_call.1} parent=1 // pred_check
      _
    $region19: #{tpu_custom_call.1} parent=1 // pred_check_branch
      %32 = sbr.rel (0) target = $region21
    $region20: #{tpu_custom_call.1} parent=1 // pred_region
      _
    $region21: #{tpu_custom_call.1} parent=1 // pred_fallthru
      _
    // Predicated region
    $region22: #{tpu_custom_call.1} parent=1 // pred_check
      _
    $region23: #{tpu_custom_call.1} parent=1 // pred_check_branch
      %34 = sbr.rel (0) target = $region25
    $region24: #{tpu_custom_call.1} parent=1 // pred_region
      _
    $region25: #{tpu_custom_call.1} parent=1 // pred_fallthru
      _
    // Predicated region
    $region26: #{tpu_custom_call.1} parent=1 // pred_check
      _
    $region27: #{tpu_custom_call.1} parent=1 // pred_check_branch
      %36 = sbr.rel (0) target = $region29
    $region28: #{tpu_custom_call.1} parent=1 // pred_region
      _
    $region29: #{tpu_custom_call.1} parent=1 // pred_fallthru
      _
    // Predicated region
    $region30: #{tpu_custom_call.1} parent=1 // pred_check
      _
    $region31: #{tpu_custom_call.1} parent=1 // pred_check_branch
      %38 = sbr.rel (0) target = $region33
    $region32: #{tpu_custom_call.1} parent=1 // pred_region
      _
    $region33: #{tpu_custom_call.1} parent=1 // pred_fallthru
      _
    // Predicated region
    $region34: #{tpu_custom_call.1} parent=1 // pred_check
      _
    $region35: #{tpu_custom_call.1} parent=1 // pred_check_branch
      %40 = sbr.rel (0) target = $region37
    $region36: #{tpu_custom_call.1} parent=1 // pred_region
      _
    $region37: #{tpu_custom_call.1} parent=1 // pred_fallthru
      _
    // Predicated region
    $region38: #{tpu_custom_call.1} parent=1 // pred_check
      _
    $region39: #{tpu_custom_call.1} parent=1 // pred_check_branch
      %42 = sbr.rel (0) target = $region41
    $region40: #{tpu_custom_call.1} parent=1 // pred_region
      _
    $region41: #{tpu_custom_call.1} parent=1 // pred_fallthru
      _
    %v43 = vld [vmem:[%s0] sm:$0xff]
    %v44 = vld [vmem:[%s0 + $0x8] sm:$0xff]
    %v45 = vld [vmem:[%s0 + $0x10] sm:$0xff]
    %v46 = vld [vmem:[%s0 + $0x18] sm:$0xff]
    %v47 = vld [vmem:[%s0 + $0x20] sm:$0xff]
    %v48 = vld [vmem:[%s0 + $0x28] sm:$0xff]
    %v49 = vld [vmem:[%s0 + $0x30] sm:$0xff]
    %v50 = vld [vmem:[%s0 + $0x38] sm:$0xff]
    %v51 = vld [vmem:[%s2] sm:$0xff]
    %v52 = vld [vmem:[%s2 + $0x8] sm:$0xff]
    %v53 = vld [vmem:[%s2 + $0x10] sm:$0xff]
    %v54 = vld [vmem:[%s2 + $0x18] sm:$0xff]
    %v55 = vld [vmem:[%s3] sm:$0x1]
    %v57 = vperm.slane %v55, 0
    %vm59 = vcmask 261120
    %v61 = vsel %vm59, %v43, 0
    %v64 = vsel %vm59, %v44, 0
    %v67 = vsel %vm59, %v45, 0
    %v70 = vsel %vm59, %v46, 0
    %v73 = vsel %vm59, %v47, 0
    %v76 = vsel %vm59, %v48, 0
    %v79 = vsel %vm59, %v49, 0
    %v82 = vsel %vm59, %v50, 0
    %84 = vmatpush.msra.mxu0 0.0
    %85 = vmatpush.msra.mxu0 0.0
    %86 = vmatpush.msra.mxu0 0.0
    %87 = vmatpush.msra.mxu0 0.0
    %88 = vmatpush.msra.mxu0 0.0
    %89 = vmatpush.msra.mxu0 0.0
    %90 = vmatpush.msra.mxu0 0.0
    %91 = vmatpush.msra.mxu0 0.0
    %92 = vmatpush.msra.mxu0 0.0
    %93 = vmatpush.msra.mxu0 0.0
    %94 = vmatpush.msra.mxu0 0.0
    %95 = vmatpush.msra.mxu0 0.0
    %96 = vmatpush.msra.mxu0 %v54
    %97 = vmatpush.msra.mxu0 %v53
    %98 = vmatpush.msra.mxu0 %v52
    %99 = vmatpush.msra.mxu0 %v51
    %100 = vmatmul.f32.gmra.mxu0 %v61
    %v101 = vpop.f32.mrf.mxu0
    %v102 = vadd.f32 %v57, %v101
    %103 = vmatmul.f32.gmra.mxu0 %v64
    %v104 = vpop.f32.mrf.mxu0
    %v105 = vadd.f32 %v57, %v104
    %106 = vmatmul.f32.gmra.mxu0 %v67
    %v107 = vpop.f32.mrf.mxu0
    %v108 = vadd.f32 %v57, %v107
    %109 = vmatmul.f32.gmra.mxu0 %v70
    %v110 = vpop.f32.mrf.mxu0
    %v111 = vadd.f32 %v57, %v110
    %112 = vmatmul.f32.gmra.mxu0 %v73
    %v113 = vpop.f32.mrf.mxu0
    %v114 = vadd.f32 %v57, %v113
    %115 = vmatmul.f32.gmra.mxu0 %v76
    %v116 = vpop.f32.mrf.mxu0
    %v117 = vadd.f32 %v57, %v116
    %118 = vmatmul.f32.gmra.mxu0 %v79
    %v119 = vpop.f32.mrf.mxu0
    %v120 = vadd.f32 %v57, %v119
    %121 = vmatmul.f32.gmra.mxu0 %v82
    %v122 = vpop.f32.mrf.mxu0
    %v123 = vadd.f32 %v57, %v122
    %124 = vdwg.mxu0
    %v125 = vmax.f32 %v102, 0.0
    %v126 = vmax.f32 %v105, 0.0
    %v127 = vmax.f32 %v108, 0.0
    %v128 = vmax.f32 %v111, 0.0
    %v129 = vmax.f32 %v114, 0.0
    %v130 = vmax.f32 %v117, 0.0
    %v131 = vmax.f32 %v120, 0.0
    %v132 = vmax.f32 %v123, 0.0
    %v133 = vld [vmem:[%s1] sm:$0xff]
    %v134 = vld [vmem:[%s1 + $0x8] sm:$0xff]
    %v135 = vld [vmem:[%s1 + $0x10] sm:$0xff]
    %v136 = vld [vmem:[%s1 + $0x18] sm:$0xff]
    %v137 = vld [vmem:[%s1 + $0x20] sm:$0xff]
    %v138 = vld [vmem:[%s1 + $0x28] sm:$0xff]
    %v139 = vld [vmem:[%s1 + $0x30] sm:$0xff]
    %v140 = vld [vmem:[%s1 + $0x38] sm:$0xff]
    %v141 = vld [vmem:[%s4] sm:$0x7]
    %vm142 = vcmask 23552
    %v144 = vsel %vm142, %v133, 0
    %v147 = vsel %vm142, %v134, 0
    %v150 = vsel %vm142, %v135, 0
    %v153 = vsel %vm142, %v136, 0
    %v156 = vsel %vm142, %v137, 0
    %v159 = vsel %vm142, %v138, 0
    %v162 = vsel %vm142, %v139, 0
    %v165 = vsel %vm142, %v140, 0
    %vm167 = vcmask 1042432
    %v169 = vsel %vm167, %v141, 0
    %171 = vmatpush.msra.mxu0 0.0
    %172 = vmatpush.msra.mxu0 0.0
    %173 = vmatpush.msra.mxu0 0.0
    %174 = vmatpush.msra.mxu0 0.0
    %175 = vmatpush.msra.mxu0 0.0
    %176 = vmatpush.msra.mxu0 0.0
    %177 = vmatpush.msra.mxu0 0.0
    %178 = vmatpush.msra.mxu0 0.0
    %179 = vmatpush.msra.mxu0 0.0
    %180 = vmatpush.msra.mxu0 0.0
    %181 = vmatpush.msra.mxu0 0.0
    %182 = vmatpush.msra.mxu0 0.0
    %183 = vmatpush.msra.mxu0 0.0
    %184 = vmatpush.msra.mxu0 0.0
    %185 = vmatpush.msra.mxu0 0.0
    %186 = vmatpush.msra.mxu0 %v169
    %187 = vmatmul.f32.gmra.mxu0 %v144
    %v188 = vpop.f32.mrf.mxu0
    %v189 = vadd.f32 0.0, %v188
    %190 = vmatmul.f32.gmra.mxu0 %v147
    %v191 = vpop.f32.mrf.mxu0
    %v192 = vadd.f32 0.0, %v191
    %193 = vmatmul.f32.gmra.mxu0 %v150
    %v194 = vpop.f32.mrf.mxu0
    %v195 = vadd.f32 0.0, %v194
    %196 = vmatmul.f32.gmra.mxu0 %v153
    %v197 = vpop.f32.mrf.mxu0
    %v198 = vadd.f32 0.0, %v197
    %199 = vmatmul.f32.gmra.mxu0 %v156
    %v200 = vpop.f32.mrf.mxu0
    %v201 = vadd.f32 0.0, %v200
    %202 = vmatmul.f32.gmra.mxu0 %v159
    %v203 = vpop.f32.mrf.mxu0
    %v204 = vadd.f32 0.0, %v203
    %205 = vmatmul.f32.gmra.mxu0 %v162
    %v206 = vpop.f32.mrf.mxu0
    %v207 = vadd.f32 0.0, %v206
    %208 = vmatmul.f32.gmra.mxu0 %v165
    %v209 = vpop.f32.mrf.mxu0
    %v210 = vadd.f32 0.0, %v209
    %211 = vdwg.mxu0
    %vm212 = vcmask 523264
    %213 = vst.msk [vmem:[#allocation4] sm:$0xff] %vm212, %v189
    %214 = vst.msk [vmem:[#allocation4 + $0x8] sm:$0xff] %vm212, %v192
    %215 = vst.msk [vmem:[#allocation4 + $0x10] sm:$0xff] %vm212, %v195
    %216 = vst.msk [vmem:[#allocation4 + $0x18] sm:$0xff] %vm212, %v198
    %217 = vst.msk [vmem:[#allocation4 + $0x20] sm:$0xff] %vm212, %v201
    %218 = vst.msk [vmem:[#allocation4 + $0x28] sm:$0xff] %vm212, %v204
    %219 = vst.msk [vmem:[#allocation4 + $0x30] sm:$0xff] %vm212, %v207
    %220 = vst.msk [vmem:[#allocation4 + $0x38] sm:$0xff] %vm212, %v210
    %v221 = vld [vmem:[%s5] sm:$0x1]
    %v223 = vperm.slane %v221, 0
    %v225 = vadd.f32 %v189, %v223
    %v226 = vadd.f32 %v192, %v223
    %v227 = vadd.f32 %v195, %v223
    %v228 = vadd.f32 %v198, %v223
    %v229 = vadd.f32 %v201, %v223
    %v230 = vadd.f32 %v204, %v223
    %v231 = vadd.f32 %v207, %v223
    %v232 = vadd.f32 %v210, %v223
    %233 = vst.msk [vmem:[#allocation2] sm:$0xff] %vm212, %v225
    %234 = vst.msk [vmem:[#allocation2 + $0x8] sm:$0xff] %vm212, %v226
    %235 = vst.msk [vmem:[#allocation2 + $0x10] sm:$0xff] %vm212, %v227
    %236 = vst.msk [vmem:[#allocation2 + $0x18] sm:$0xff] %vm212, %v228
    %237 = vst.msk [vmem:[#allocation2 + $0x20] sm:$0xff] %vm212, %v229
    %238 = vst.msk [vmem:[#allocation2 + $0x28] sm:$0xff] %vm212, %v230
    %239 = vst.msk [vmem:[#allocation2 + $0x30] sm:$0xff] %vm212, %v231
    %240 = vst.msk [vmem:[#allocation2 + $0x38] sm:$0xff] %vm212, %v232
    %v241 = vld [vmem:[%s6] sm:$0xff]
    %v242 = vld [vmem:[%s6 + $0x8] sm:$0xff]
    %v243 = vld [vmem:[%s6 + $0x10] sm:$0xff]
    %v244 = vld [vmem:[%s6 + $0x18] sm:$0xff]
    %v245 = vld [vmem:[%s8] sm:$0x1]
    %v247 = vperm.slane %v245, 0
    %v250 = vsel %vm59, %v125, 0
    %v253 = vsel %vm59, %v126, 0
    %v256 = vsel %vm59, %v127, 0
    %v259 = vsel %vm59, %v128, 0
    %v262 = vsel %vm59, %v129, 0
    %v265 = vsel %vm59, %v130, 0
    %v268 = vsel %vm59, %v131, 0
    %v271 = vsel %vm59, %v132, 0
    %273 = vmatpush.msra.mxu0 0.0
    %274 = vmatpush.msra.mxu0 0.0
    %275 = vmatpush.msra.mxu0 0.0
    %276 = vmatpush.msra.mxu0 0.0
    %277 = vmatpush.msra.mxu0 0.0
    %278 = vmatpush.msra.mxu0 0.0
    %279 = vmatpush.msra.mxu0 0.0
    %280 = vmatpush.msra.mxu0 0.0
    %281 = vmatpush.msra.mxu0 0.0
    %282 = vmatpush.msra.mxu0 0.0
    %283 = vmatpush.msra.mxu0 0.0
    %284 = vmatpush.msra.mxu0 0.0
    %285 = vmatpush.msra.mxu0 %v244
    %286 = vmatpush.msra.mxu0 %v243
    %287 = vmatpush.msra.mxu0 %v242
    %288 = vmatpush.msra.mxu0 %v241
    %289 = vmatmul.f32.gmra.mxu0 %v250
    %v290 = vpop.f32.mrf.mxu0
    %v291 = vadd.f32 %v247, %v290
    %292 = vmatmul.f32.gmra.mxu0 %v253
    %v293 = vpop.f32.mrf.mxu0
    %v294 = vadd.f32 %v247, %v293
    %295 = vmatmul.f32.gmra.mxu0 %v256
    %v296 = vpop.f32.mrf.mxu0
    %v297 = vadd.f32 %v247, %v296
    %298 = vmatmul.f32.gmra.mxu0 %v259
    %v299 = vpop.f32.mrf.mxu0
    %v300 = vadd.f32 %v247, %v299
    %301 = vmatmul.f32.gmra.mxu0 %v262
    %v302 = vpop.f32.mrf.mxu0
    %v303 = vadd.f32 %v247, %v302
    %304 = vmatmul.f32.gmra.mxu0 %v265
    %v305 = vpop.f32.mrf.mxu0
    %v306 = vadd.f32 %v247, %v305
    %307 = vmatmul.f32.gmra.mxu0 %v268
    %v308 = vpop.f32.mrf.mxu0
    %v309 = vadd.f32 %v247, %v308
    %310 = vmatmul.f32.gmra.mxu0 %v271
    %v311 = vpop.f32.mrf.mxu0
    %v312 = vadd.f32 %v247, %v311
    %313 = vdwg.mxu0
    %314 = vst.msk [vmem:[#allocation6] sm:$0xff] %vm212, %v291
    %315 = vst.msk [vmem:[#allocation6 + $0x8] sm:$0xff] %vm212, %v294
    %316 = vst.msk [vmem:[#allocation6 + $0x10] sm:$0xff] %vm212, %v297
    %317 = vst.msk [vmem:[#allocation6 + $0x18] sm:$0xff] %vm212, %v300
    %318 = vst.msk [vmem:[#allocation6 + $0x20] sm:$0xff] %vm212, %v303
    %319 = vst.msk [vmem:[#allocation6 + $0x28] sm:$0xff] %vm212, %v306
    %320 = vst.msk [vmem:[#allocation6 + $0x30] sm:$0xff] %vm212, %v309
    %321 = vst.msk [vmem:[#allocation6 + $0x38] sm:$0xff] %vm212, %v312
    %v322 = vld [vmem:[%s7] sm:$0xff]
    %v323 = vld [vmem:[%s7 + $0x8] sm:$0xff]
    %v324 = vld [vmem:[%s7 + $0x10] sm:$0xff]
    %v325 = vld [vmem:[%s7 + $0x18] sm:$0xff]
    %326 = vmatpush.msra.mxu0 0.0
    %327 = vmatpush.msra.mxu0 0.0
    %328 = vmatpush.msra.mxu0 0.0
    %329 = vmatpush.msra.mxu0 0.0
    %330 = vmatpush.msra.mxu0 0.0
    %331 = vmatpush.msra.mxu0 0.0
    %332 = vmatpush.msra.mxu0 0.0
    %333 = vmatpush.msra.mxu0 0.0
    %334 = vmatpush.msra.mxu0 0.0
    %335 = vmatpush.msra.mxu0 0.0
    %336 = vmatpush.msra.mxu0 0.0
    %337 = vmatpush.msra.mxu0 0.0
    %338 = vmatpush.msra.mxu0 %v325
    %339 = vmatpush.msra.mxu0 %v324
    %340 = vmatpush.msra.mxu0 %v323
    %341 = vmatpush.msra.mxu0 %v322
    %342 = vmatmul.f32.gmra.mxu0 %v250
    %v343 = vpop.f32.mrf.mxu0
    %v344 = vadd.f32 0.0, %v343
    %345 = vmatmul.f32.gmra.mxu0 %v253
    %v346 = vpop.f32.mrf.mxu0
    %v347 = vadd.f32 0.0, %v346
    %348 = vmatmul.f32.gmra.mxu0 %v256
    %v349 = vpop.f32.mrf.mxu0
    %v350 = vadd.f32 0.0, %v349
    %351 = vmatmul.f32.gmra.mxu0 %v259
    %v352 = vpop.f32.mrf.mxu0
    %v353 = vadd.f32 0.0, %v352
    %354 = vmatmul.f32.gmra.mxu0 %v262
    %v355 = vpop.f32.mrf.mxu0
    %v356 = vadd.f32 0.0, %v355
    %357 = vmatmul.f32.gmra.mxu0 %v265
    %v358 = vpop.f32.mrf.mxu0
    %v359 = vadd.f32 0.0, %v358
    %360 = vmatmul.f32.gmra.mxu0 %v268
    %v361 = vpop.f32.mrf.mxu0
    %v362 = vadd.f32 0.0, %v361
    %363 = vmatmul.f32.gmra.mxu0 %v271
    %v364 = vpop.f32.mrf.mxu0
    %v365 = vadd.f32 0.0, %v364
    %366 = vdwg.mxu0
    %367 = vst.msk [vmem:[#allocation7] sm:$0xff] %vm212, %v344
    %368 = vst.msk [vmem:[#allocation7 + $0x8] sm:$0xff] %vm212, %v347
    %369 = vst.msk [vmem:[#allocation7 + $0x10] sm:$0xff] %vm212, %v350
    %370 = vst.msk [vmem:[#allocation7 + $0x18] sm:$0xff] %vm212, %v353
    %371 = vst.msk [vmem:[#allocation7 + $0x20] sm:$0xff] %vm212, %v356
    %372 = vst.msk [vmem:[#allocation7 + $0x28] sm:$0xff] %vm212, %v359
    %373 = vst.msk [vmem:[#allocation7 + $0x30] sm:$0xff] %vm212, %v362
    %374 = vst.msk [vmem:[#allocation7 + $0x38] sm:$0xff] %vm212, %v365
    %v375 = vld [vmem:[%s9] sm:$0xff]
    %v376 = vld [vmem:[%s9 + $0x8] sm:$0xff]
    %v377 = vld [vmem:[%s9 + $0x10] sm:$0xff]
    %v378 = vld [vmem:[%s9 + $0x18] sm:$0xff]
    %379 = vmatpush.msra.mxu0 0.0
    %380 = vmatpush.msra.mxu0 0.0
    %381 = vmatpush.msra.mxu0 0.0
    %382 = vmatpush.msra.mxu0 0.0
    %383 = vmatpush.msra.mxu0 0.0
    %384 = vmatpush.msra.mxu0 0.0
    %385 = vmatpush.msra.mxu0 0.0
    %386 = vmatpush.msra.mxu0 0.0
    %387 = vmatpush.msra.mxu0 0.0
    %388 = vmatpush.msra.mxu0 0.0
    %389 = vmatpush.msra.mxu0 0.0
    %390 = vmatpush.msra.mxu0 0.0
    %391 = vmatpush.msra.mxu0 %v378
    %392 = vmatpush.msra.mxu0 %v377
    %393 = vmatpush.msra.mxu0 %v376
    %394 = vmatpush.msra.mxu0 %v375
    %395 = vmatmul.f32.gmra.mxu0 %v250
    %v396 = vpop.f32.mrf.mxu0
    %v397 = vadd.f32 0.0, %v396
    %398 = vmatmul.f32.gmra.mxu0 %v253
    %v399 = vpop.f32.mrf.mxu0
    %v400 = vadd.f32 0.0, %v399
    %401 = vmatmul.f32.gmra.mxu0 %v256
    %v402 = vpop.f32.mrf.mxu0
    %v403 = vadd.f32 0.0, %v402
    %404 = vmatmul.f32.gmra.mxu0 %v259
    %v405 = vpop.f32.mrf.mxu0
    %v406 = vadd.f32 0.0, %v405
    %407 = vmatmul.f32.gmra.mxu0 %v262
    %v408 = vpop.f32.mrf.mxu0
    %v409 = vadd.f32 0.0, %v408
    %410 = vmatmul.f32.gmra.mxu0 %v265
    %v411 = vpop.f32.mrf.mxu0
    %v412 = vadd.f32 0.0, %v411
    %413 = vmatmul.f32.gmra.mxu0 %v268
    %v414 = vpop.f32.mrf.mxu0
    %v415 = vadd.f32 0.0, %v414
    %416 = vmatmul.f32.gmra.mxu0 %v271
    %v417 = vpop.f32.mrf.mxu0
    %v418 = vadd.f32 0.0, %v417
    %419 = vdwg.mxu0
    %420 = vst.msk [vmem:[%s14] sm:$0xff] %vm59, %v397
    %421 = vst.msk [vmem:[%s14 + $0x8] sm:$0xff] %vm59, %v400
    %422 = vst.msk [vmem:[%s14 + $0x10] sm:$0xff] %vm59, %v403
    %423 = vst.msk [vmem:[%s14 + $0x18] sm:$0xff] %vm59, %v406
    %424 = vst.msk [vmem:[%s14 + $0x20] sm:$0xff] %vm59, %v409
    %425 = vst.msk [vmem:[%s14 + $0x28] sm:$0xff] %vm59, %v412
    %426 = vst.msk [vmem:[%s14 + $0x30] sm:$0xff] %vm59, %v415
    %427 = vst.msk [vmem:[%s14 + $0x38] sm:$0xff] %vm59, %v418
    // Predicated region
    $region42: #{tpu_custom_call.1} parent=1 // pred_check
      _
    $region43: #{tpu_custom_call.1} parent=1 // pred_check_branch
      %429 = sbr.rel (0) target = $region45
    $region44: #{tpu_custom_call.1} parent=1 // pred_region
      %431 = vsyncadd [#allocation3], 0
      %s432 = sshll.u32 [#allocation2], 4
      %s433 = int_to_ptr.vmem [resolvable:$true] %s432
      %s434 = sshll.u32 %s10, 4
      %s435 = int_to_ptr.hbm [resolvable:$true] %s434
      %440 = dma.vmem_to_hbm [thread:$0]  %s433, 1024, %s435, [#allocation3], 128, 128, 8
    $region45: #{tpu_custom_call.1} parent=1 // pred_fallthru
      _
    // Predicated region
    $region46: #{tpu_custom_call.1} parent=1 // pred_check
      _
    $region47: #{tpu_custom_call.1} parent=1 // pred_check_branch
      %442 = sbr.rel (0) target = $region49
    $region48: #{tpu_custom_call.1} parent=1 // pred_region
      %444 = vsyncadd [#allocation5], 0
      %s445 = sshll.u32 [#allocation4], 4
      %s446 = int_to_ptr.vmem [resolvable:$true] %s445
      %s447 = sshll.u32 %s11, 4
      %s448 = int_to_ptr.hbm [resolvable:$true] %s447
      %453 = dma.vmem_to_hbm [thread:$0]  %s446, 1024, %s448, [#allocation5], 128, 128, 8
    $region49: #{tpu_custom_call.1} parent=1 // pred_fallthru
      _
    // Predicated region
    $region50: #{tpu_custom_call.1} parent=1 // pred_check
      _
    $region51: #{tpu_custom_call.1} parent=1 // pred_check_branch
      %455 = sbr.rel (0) target = $region53
    $region52: #{tpu_custom_call.1} parent=1 // pred_region
      %457 = vsyncadd [#allocation5], 0
      %s458 = sshll.u32 [#allocation6], 4
      %s459 = int_to_ptr.vmem [resolvable:$true] %s458
      %s460 = sshll.u32 %s12, 4
      %s461 = int_to_ptr.hbm [resolvable:$true] %s460
      %466 = dma.vmem_to_hbm [thread:$0]  %s459, 1024, %s461, [#allocation5], 128, 128, 8
    $region53: #{tpu_custom_call.1} parent=1 // pred_fallthru
      _
    // Predicated region
    $region54: #{tpu_custom_call.1} parent=1 // pred_check
      _
    $region55: #{tpu_custom_call.1} parent=1 // pred_check_branch
      %468 = sbr.rel (0) target = $region57
    $region56: #{tpu_custom_call.1} parent=1 // pred_region
      %470 = vsyncadd [#allocation8], 0
      %s471 = sshll.u32 [#allocation7], 4
      %s472 = int_to_ptr.vmem [resolvable:$true] %s471
      %s473 = sshll.u32 %s13, 4
      %s474 = int_to_ptr.hbm [resolvable:$true] %s473
      %479 = dma.vmem_to_hbm [thread:$0]  %s472, 1024, %s474, [#allocation8], 128, 128, 8
    $region57: #{tpu_custom_call.1} parent=1 // pred_fallthru
      _
    // Predicated region
    $region58: #{tpu_custom_call.1} parent=1 // pred_check
      _
    $region59: #{tpu_custom_call.1} parent=1 // pred_check_branch
      %481 = sbr.rel (0) target = $region61
    $region60: #{tpu_custom_call.1} parent=1 // pred_region
      _
    $region61: #{tpu_custom_call.1} parent=1 // pred_fallthru
      _
    // Predicated region
    $region62: #{tpu_custom_call.1} parent=1 // pred_check
      _
    $region63: #{tpu_custom_call.1} parent=1 // pred_check_branch
      %483 = sbr.rel (0) target = $region65
    $region64: #{tpu_custom_call.1} parent=1 // pred_region
      %485 = dma.done [#allocation3], 1024
    $region65: #{tpu_custom_call.1} parent=1 // pred_fallthru
      _
    // Predicated region
    $region66: #{tpu_custom_call.1} parent=1 // pred_check
      _
    $region67: #{tpu_custom_call.1} parent=1 // pred_check_branch
      %487 = sbr.rel (0) target = $region69
    $region68: #{tpu_custom_call.1} parent=1 // pred_region
      %489 = dma.done [#allocation5], 1024
    $region69: #{tpu_custom_call.1} parent=1 // pred_fallthru
      _
    // Predicated region
    $region70: #{tpu_custom_call.1} parent=1 // pred_check
      _
    $region71: #{tpu_custom_call.1} parent=1 // pred_check_branch
      %491 = sbr.rel (0) target = $region73
    $region72: #{tpu_custom_call.1} parent=1 // pred_region
      %493 = dma.done [#allocation5], 1024
    $region73: #{tpu_custom_call.1} parent=1 // pred_fallthru
      _
    // Predicated region
    $region74: #{tpu_custom_call.1} parent=1 // pred_check
      _
    $region75: #{tpu_custom_call.1} parent=1 // pred_check_branch
      %495 = sbr.rel (0) target = $region77
    $region76: #{tpu_custom_call.1} parent=1 // pred_region
      %497 = dma.done [#allocation8], 1024
    $region77: #{tpu_custom_call.1} parent=1 // pred_fallthru
      _
    // Predicated region
    $region78: #{tpu_custom_call.1} parent=1 // pred_check
      _
    $region79: #{tpu_custom_call.1} parent=1 // pred_check_branch
      %499 = sbr.rel (0) target = $region81
    $region80: #{tpu_custom_call.1} parent=1 // pred_region
      _
    $region81: #{tpu_custom_call.1} parent=1 // pred_fallthru
      _
    %500 = vsyncpa [#allocation3], 1
    %501 = vsyncpa [#allocation5], 1
    %502 = vsyncpa [#allocation8], 1

</llo_original>
